<compile_context>
chip_gen: v7x
topology: tpu7x:2x2x1
jax: 0.10.0
libtpu: 0.0.40
codegen_flags: <defaults>
</compile_context>

<pallas_src>
import functools

import jax
import jax.numpy as jnp
from jax.experimental import pallas as pl
from jax.experimental.pallas import tpu as pltpu

EPS = 0.01
LANE = 128
SUBL = 32                             # independent accumulation rows (4 sublane groups)
SUM_BLOCK_BYTES = 2 * 1024 * 1024     # ~2 MiB per input block (sum path)
ELEM_BLOCK_BYTES = 2 * 1024 * 1024    # ~2 MiB per input block ('none' path)
VMEM_LIMIT = 48 * 1024 * 1024         # explicit scoped-VMEM request (v5e default is 16 MiB)


def _round_up(x, m):
    return ((x + m - 1) // m) * m


def _pick_tm(rows, block_bytes, itemsize):
    """Block row count: the full array if it fits in one block, else a fixed
    dtype-aware cap (multiple of SUBL, hence of 8).  No divisor search, so the
    DMA block size is independent of the row count."""
    cap = max(SUBL, (block_bytes // (LANE * itemsize)) // SUBL * SUBL)
    return rows if rows <= cap else cap


def _pick_subl(tm):
    for d in (SUBL, 16, 8, 4, 2):
        if tm % d == 0:
            return d
    return 1


def _prep(x):
    """Flatten to (rows, 128) in the input dtype.

    Zero padding is added only when numel is not a multiple of 128 (the pad
    contributes exactly 0 to the weighted sum and is sliced off for
    reduction='none').  Row-count raggedness is handled in-kernel, so padding
    to a multiple of 8*128 is never needed."""
    flat = x.reshape(-1)
    numel = flat.shape[0]
    padded = _round_up(max(numel, 1), LANE)
    pad = padded - numel
    if pad:
        # TODO(synk): eliminate this last copy too (needs 1-D blocks or a
        # manual-DMA tail path to mask a partially valid 128-lane row).
        flat = jnp.pad(flat, (0, pad))
    return flat.reshape(padded // LANE, LANE), numel, bool(pad)


# ----------------------------- kernels -------------------------------------


def _wmse_sum_kernel(p_ref, t_ref, o_ref, acc_ref, *, tm, valid_rows, subl, scale):
    """Per-chunk partial sum of (pred - target)^2 * ((2-eps)*target + eps)."""
    c = pl.program_id(0)
    s = pl.program_id(1)
    steps = pl.num_programs(1)

    @pl.when(s == 0)
    def _():
        acc_ref[...] = jnp.zeros_like(acc_ref)

    p = p_ref[...].astype(jnp.float32)
    t = t_ref[...].astype(jnp.float32)
    d = p - t
    e = d * d * ((2.0 - EPS) * t + EPS)

    if valid_rows is not None:
        # Row-validity mask: handles (a) the ragged last block of the cdiv grid
        # and (b) whole overhanging steps when nblocks % n_chunks != 0 (their
        # DMA index is clamped in the index_map; the unclamped row ids land
        # >= valid_rows, so they contribute exactly 0).  One select per vreg.
        row0 = (c * steps + s) * tm
        rows_in_blk = jax.lax.broadcasted_iota(jnp.int32, (tm, LANE), 0)
        e = jnp.where(rows_in_blk + row0 < valid_rows, e, 0.0)

    # `subl` independent (1,128)-row accumulation chains: tm/subl dependent
    # VALU adds instead of tm/8, keeping each step DMA-bound.
    acc_ref[...] += jnp.sum(e.reshape(-1, subl, LANE), axis=0)

    @pl.when(s == steps - 1)
    def _():
        # Static scale (loss_weight, and 1/numel for the plain mean) folded in
        # here, off the per-step critical path.
        o_ref[...] = (scale * acc_ref[...]).reshape(1, subl, LANE)


def _wmse_elem_kernel(p_ref, t_ref, o_ref, *, loss_weight):
    """Elementwise weighted squared error, loss_weight fused (reduction='none')."""
    p = p_ref[...].astype(jnp.float32)
    t = t_ref[...].astype(jnp.float32)
    d = p - t
    e = d * d * ((2.0 - EPS) * t + EPS)
    # Rows past the array end (ragged last block) are dropped by Pallas on
    # write-back, so no masking is needed here.
    # NOTE: for fp16 inputs the final f32->fp16 downcast can saturate for very
    # large errors; PyTorch computes in fp16 throughout, so behavior is comparable.
    o_ref[...] = (loss_weight * e).astype(o_ref.dtype)


# ----------------------------- pallas wrappers ------------------------------


def _wmse_sum(p2, t2, scale):
    rows = p2.shape[0]
    itemsize = max(p2.dtype.itemsize, t2.dtype.itemsize)
    tm = _pick_tm(rows, SUM_BLOCK_BYTES, itemsize)
    subl = _pick_subl(tm)
    nblocks = pl.cdiv(rows, tm)
    n_chunks = 2 if nblocks >= 2 else 1       # >=2 -> both v7x TensorCores get work
    steps = pl.cdiv(nblocks, n_chunks)
    needs_mask = (n_chunks * steps * tm) != rows

    def in_map(c, s):
        # Clamp so the DMA source stays in bounds; overhanging steps re-reference
        # the previous block (no re-fetch) and are fully masked in-kernel.
        return (jnp.minimum(c * steps + s, nblocks - 1), 0)

    kernel = functools.partial(
        _wmse_sum_kernel, tm=tm,
        valid_rows=rows if needs_mask else None,
        subl=subl, scale=scale)

    partials = pl.pallas_call(
        kernel,
        out_shape=jax.ShapeDtypeStruct((n_chunks, subl, LANE), jnp.float32),
        grid_spec=pltpu.PrefetchScalarGridSpec(
            num_scalar_prefetch=0,
            grid=(n_chunks, steps),
            in_specs=[pl.BlockSpec((tm, LANE), in_map),
                      pl.BlockSpec((tm, LANE), in_map)],
            out_specs=pl.BlockSpec((1, subl, LANE), lambda c, s: (c, 0, 0)),
            scratch_shapes=[pltpu.VMEM((subl, LANE), jnp.float32)],
        ),
        compiler_params=pltpu.CompilerParams(
            dimension_semantics=("parallel", "arbitrary"),
            vmem_limit_bytes=VMEM_LIMIT),
    )(p2, t2)
    # Tiny trailing reduction over <= 2*subl*128 lane-dense partials.
    return jnp.sum(partials)


def _wmse_none(p2, t2, loss_weight, out_dtype):
    rows = p2.shape[0]
    itemsize = max(p2.dtype.itemsize, t2.dtype.itemsize,
                   jnp.dtype(out_dtype).itemsize)
    tm = _pick_tm(rows, ELEM_BLOCK_BYTES, itemsize)
    kernel = functools.partial(_wmse_elem_kernel, loss_weight=loss_weight)
    return pl.pallas_call(
        kernel,
        out_shape=jax.ShapeDtypeStruct((rows, LANE), out_dtype),
        grid_spec=pltpu.PrefetchScalarGridSpec(
            num_scalar_prefetch=0,
            grid=(pl.cdiv(rows, tm),),
            in_specs=[pl.BlockSpec((tm, LANE), lambda i: (i, 0)),
                      pl.BlockSpec((tm, LANE), lambda i: (i, 0))],
            out_specs=pl.BlockSpec((tm, LANE), lambda i: (i, 0)),
        ),
        compiler_params=pltpu.CompilerParams(
            dimension_semantics=("parallel",),
            vmem_limit_bytes=VMEM_LIMIT),
    )(p2, t2)


@functools.partial(jax.jit, static_argnames=("reduction", "loss_weight"))
def weight_mse_loss(pred, target, avg_factor=None, reduction="mean",
                    loss_weight=1.0):
    assert reduction in ("none", "mean", "sum")
    if avg_factor is not None and reduction == "sum":
        raise ValueError('avg_factor can not be used with reduction="sum"')

    orig_shape = pred.shape
    p2, numel, padded = _prep(pred)
    t2, _, _ = _prep(target)

    if reduction == "none":
        out_dtype = (pred.dtype if jnp.issubdtype(pred.dtype, jnp.floating)
                     else jnp.float32)
        out = _wmse_none(p2, t2, float(loss_weight), out_dtype).reshape(-1)
        if padded:                      # only when numel % 128 != 0
            out = out[:numel]
        return out.reshape(orig_shape)

    # 'mean' / 'sum': fold loss_weight (and 1/numel for the plain mean) into
    # the kernel's finalize step; a traced avg_factor divides outside.
    # NOTE: loss_weight is a static arg (matches the module, which fixes it at
    # construction); callers varying it per step would trigger recompiles.
    scale = float(loss_weight)
    if reduction == "mean" and avg_factor is None:
        scale = scale / float(numel)
    s = _wmse_sum(p2, t2, scale)
    if reduction == "mean" and avg_factor is not None:
        s = s / avg_factor
    return s


class WeightMSELoss:
    """JAX/Pallas port of nuhtc WeightMSELoss (no learnable parameters)."""

    def __init__(self, reduction="mean", loss_weight=1.0):
        self.reduction = reduction
        self.loss_weight = loss_weight
        self.eps = EPS

    def __call__(self, pred, target, weight=None, avg_factor=None,
                 reduction_override=None):
        assert reduction_override in (None, "none", "mean", "sum")
        reduction = reduction_override if reduction_override else self.reduction
        # NOTE: matching the PyTorch module, the externally supplied `weight`
        # is ignored -- the module overwrites it with (2-eps)*target + eps,
        # which is fused inside the kernels here.
        return weight_mse_loss(pred, target, avg_factor=avg_factor,
                               reduction=reduction,
                               loss_weight=float(self.loss_weight))


if __name__ == "__main__":
    key = jax.random.PRNGKey(0)
    kp, kt, kp2, kt2, kp3, kt3 = jax.random.split(key, 6)

    # NCHW heatmap-like inputs: batch=2, channels=4, spatial=16x16.
    pred = jax.random.normal(kp, (2, 4, 16, 16), dtype=jnp.float32)
    target = jax.random.uniform(kt, (2, 4, 16, 16), dtype=jnp.float32)

    mod = WeightMSELoss(reduction="mean", loss_weight=1.0)

    # Pure-JAX reference (not in the kernel hot path).
    elem_ref = (pred - target) ** 2 * ((2.0 - EPS) * target + EPS)

    loss = jax.block_until_ready(mod(pred, target))
    assert jnp.allclose(loss, jnp.mean(elem_ref), rtol=1e-5, atol=1e-6), loss

    loss_none = jax.block_until_ready(mod(pred, target, reduction_override="none"))
    assert loss_none.shape == pred.shape and loss_none.dtype == pred.dtype
    assert jnp.allclose(loss_none, elem_ref, rtol=1e-5, atol=1e-6)

    loss_sum = jax.block_until_ready(mod(pred, target, reduction_override="sum"))
    assert jnp.allclose(loss_sum, jnp.sum(elem_ref), rtol=1e-5, atol=1e-6)

    # Unaligned numel (945) exercises the (rare) lane-pad tail path.
    pred_o = jax.random.normal(kp2, (3, 5, 7, 9), dtype=jnp.float32)
    targ_o = jax.random.uniform(kt2, (3, 5, 7, 9), dtype=jnp.float32)
    ref_o = (pred_o - targ_o) ** 2 * ((2.0 - EPS) * targ_o + EPS)
    l_o = jax.block_until_ready(mod(pred_o, targ_o))
    assert jnp.allclose(l_o, jnp.mean(ref_o), rtol=1e-5, atol=1e-6)
    l_o_none = jax.block_until_ready(mod(pred_o, targ_o, reduction_override="none"))
    assert l_o_none.shape == pred_o.shape
    assert jnp.allclose(l_o_none, ref_o, rtol=1e-5, atol=1e-6)

    # Multi-block, odd block count, ragged last block: exercises the 2-chunk
    # parallel reduction, the cdiv grid, the index clamp and the row mask.
    pred_big = jax.random.normal(kp3, (8200, 128), dtype=jnp.float32)
    targ_big = jax.random.uniform(kt3, (8200, 128), dtype=jnp.float32)
    ref_big = (pred_big - targ_big) ** 2 * ((2.0 - EPS) * targ_big + EPS)
    l_big = jax.block_until_ready(mod(pred_big, targ_big))
    assert jnp.allclose(l_big, jnp.mean(ref_big), rtol=1e-4, atol=1e-6)
    l_big_none = jax.block_until_ready(mod(pred_big, targ_big, reduction_override="none"))
    assert jnp.allclose(l_big_none, ref_big, rtol=1e-5, atol=1e-6)

    # bf16 inputs stream as bf16; compute is f32 in VMEM; 'none' output stays bf16.
    pred_b = pred.astype(jnp.bfloat16)
    targ_b = target.astype(jnp.bfloat16)
    ref_b = ((pred_b.astype(jnp.float32) - targ_b.astype(jnp.float32)) ** 2
             * ((2.0 - EPS) * targ_b.astype(jnp.float32) + EPS))
    loss_b = jax.block_until_ready(mod(pred_b, targ_b))
    assert jnp.allclose(loss_b, jnp.mean(ref_b), rtol=2e-2, atol=1e-3)
    none_b = jax.block_until_ready(mod(pred_b, targ_b, reduction_override="none"))
    assert none_b.dtype == jnp.bfloat16

    # avg_factor as a traced value (no recompile per value).
    af = jnp.float32(1000.0)
    l_af = jax.block_until_ready(mod(pred, target, avg_factor=af))
    assert jnp.allclose(l_af, jnp.sum(elem_ref) / 1000.0, rtol=1e-5)

    print("KERNEL_OK")
</pallas_src>

<mosaic_0001>
module attributes {stable_mosaic.version = 11 : i64} {
  func.func @_wmse_sum_kernel(%arg0: i32, %arg1: i32, %arg2: memref<16x128xf32, #tpu.memory_space<vmem>>, %arg3: memref<16x128xf32, #tpu.memory_space<vmem>>, %arg4: memref<1x16x128xf32, #tpu.memory_space<vmem>>, %arg5: memref<16x128xf32, #tpu.memory_space<vmem>>) attributes {dimension_semantics = [#tpu.dimension_semantics<parallel>, #tpu.dimension_semantics<arbitrary>], iteration_bounds = array<i64: 1, 1>, scalar_prefetch = 0 : i64, scratch_operands = 1 : i64, tpu.core_type = #tpu.core_type<tc>, window_params = [{transform_indices = @transform_0, window_bounds = array<i64: 16, 128>}, {transform_indices = @transform_1, window_bounds = array<i64: 16, 128>}, {transform_indices = @transform_2, window_bounds = array<i64: 1, 16, 128>}]} {
    %c0_i32 = arith.constant 0 : i32
    %0 = arith.cmpi eq, %arg1, %c0_i32 : i32
    %1 = arith.extui %0 : i1 to i32
    %c0_i32_0 = arith.constant 0 : i32
    %2 = arith.cmpi ne, %1, %c0_i32_0 : i32
    scf.if %2 {
      %cst_12 = arith.constant 0.000000e+00 : f32
      %20 = vector.broadcast %cst_12 : f32 to vector<16x128xf32>
      %c0_13 = arith.constant 0 : index
      %c0_14 = arith.constant 0 : index
      %21 = vector.load %arg5[%c0_13, %c0_14] : memref<16x128xf32, #tpu.memory_space<vmem>>, vector<16x128xf32>
      tpu.vector_store %arg5[%c0_13, %c0_14], %20 {strides = array<i32>} : memref<16x128xf32, #tpu.memory_space<vmem>>, vector<16x128xf32>,
    } else {
    }
    %c0 = arith.constant 0 : index
    %c0_1 = arith.constant 0 : index
    %3 = vector.load %arg2[%c0, %c0_1] : memref<16x128xf32, #tpu.memory_space<vmem>>, vector<16x128xf32>
    %c0_2 = arith.constant 0 : index
    %c0_3 = arith.constant 0 : index
    %4 = vector.load %arg3[%c0_2, %c0_3] : memref<16x128xf32, #tpu.memory_space<vmem>>, vector<16x128xf32>
    %5 = arith.subf %3, %4 : vector<16x128xf32>
    %6 = arith.mulf %5, %5 : vector<16x128xf32>
    %cst = arith.constant 1.990000e+00 : f32
    %7 = vector.broadcast %cst : f32 to vector<16x128xf32>
    %8 = arith.mulf %7, %4 : vector<16x128xf32>
    %cst_4 = arith.constant 0.00999999977 : f32
    %9 = vector.broadcast %cst_4 : f32 to vector<16x128xf32>
    %10 = arith.addf %8, %9 : vector<16x128xf32>
    %11 = arith.mulf %6, %10 : vector<16x128xf32>
    %c0_5 = arith.constant 0 : index
    %c0_6 = arith.constant 0 : index
    %12 = vector.load %arg5[%c0_5, %c0_6] : memref<16x128xf32, #tpu.memory_space<vmem>>, vector<16x128xf32>
    %13 = vector.shape_cast %11 : vector<16x128xf32> to vector<1x16x128xf32>
    %cst_7 = arith.constant dense<0.000000e+00> : vector<16x128xf32>
    %14 = vector.multi_reduction <add>, %13, %cst_7 [0] : vector<1x16x128xf32> to vector<16x128xf32>
    %15 = arith.addf %12, %14 : vector<16x128xf32>
    %c0_8 = arith.constant 0 : index
    %c0_9 = arith.constant 0 : index
    %16 = vector.load %arg5[%c0_8, %c0_9] : memref<16x128xf32, #tpu.memory_space<vmem>>, vector<16x128xf32>
    tpu.vector_store %arg5[%c0_8, %c0_9], %15 {strides = array<i32>} : memref<16x128xf32, #tpu.memory_space<vmem>>, vector<16x128xf32>,
    %c0_i32_10 = arith.constant 0 : i32
    %17 = arith.cmpi eq, %arg1, %c0_i32_10 : i32
    %18 = arith.extui %17 : i1 to i32
    %c0_i32_11 = arith.constant 0 : i32
    %19 = arith.cmpi ne, %18, %c0_i32_11 : i32
    scf.if %19 {
      %c0_12 = arith.constant 0 : index
      %c0_13 = arith.constant 0 : index
      %20 = vector.load %arg5[%c0_12, %c0_13] : memref<16x128xf32, #tpu.memory_space<vmem>>, vector<16x128xf32>
      %cst_14 = arith.constant 4.8828125E-4 : f32
      %21 = vector.broadcast %cst_14 : f32 to vector<16x128xf32>
      %22 = arith.mulf %21, %20 : vector<16x128xf32>
      %23 = vector.shape_cast %22 : vector<16x128xf32> to vector<1x16x128xf32>
      %c0_15 = arith.constant 0 : index
      %c0_16 = arith.constant 0 : index
      %c0_17 = arith.constant 0 : index
      %24 = vector.load %arg4[%c0_15, %c0_16, %c0_17] : memref<1x16x128xf32, #tpu.memory_space<vmem>>, vector<1x16x128xf32>
      tpu.vector_store %arg4[%c0_15, %c0_16, %c0_17], %23 {strides = array<i32>} : memref<1x16x128xf32, #tpu.memory_space<vmem>>, vector<1x16x128xf32>,
    } else {
    }
    return
  }
  func.func @transform_0(%arg0: i32, %arg1: i32) -> (i32, i32) {
    %c1_i32 = arith.constant 1 : i32
    %0 = arith.muli %arg0, %c1_i32 : i32
    %1 = arith.addi %0, %arg1 : i32
    %c0_i32 = arith.constant 0 : i32
    %2 = arith.minsi %1, %c0_i32 : i32
    %c0_i32_0 = arith.constant 0 : i32
    %c0_i32_1 = arith.constant 0 : i32
    return %2, %c0_i32_0 : i32, i32
  }
  func.func @transform_1(%arg0: i32, %arg1: i32) -> (i32, i32) {
    %c1_i32 = arith.constant 1 : i32
    %0 = arith.muli %arg0, %c1_i32 : i32
    %1 = arith.addi %0, %arg1 : i32
    %c0_i32 = arith.constant 0 : i32
    %2 = arith.minsi %1, %c0_i32 : i32
    %c0_i32_0 = arith.constant 0 : i32
    %c0_i32_1 = arith.constant 0 : i32
    return %2, %c0_i32_0 : i32, i32
  }
  func.func @transform_2(%arg0: i32, %arg1: i32) -> (i32, i32, i32) {
    %c0_i32 = arith.constant 0 : i32
    %c0_i32_0 = arith.constant 0 : i32
    %c0_i32_1 = arith.constant 0 : i32
    return %arg0, %c0_i32, %c0_i32_0 : i32, i32, i32
  }
}

</mosaic_0001>

<llo_original>
// kernel: weight_mse_loss.1
$region0: #{weight_mse_loss.1}
  #allocation0 [shape = 'u32[]', space=smem, size = 0x4, offset = 0x4, fixed_abs, tag = 'smem constant byte address 0x4 - core index']
  #allocation1 [shape = 'u32[144,128]{1,0:T(1,128)}', space=vmem, size = 0x12000, scoped, tag = 'internal scratch']
  #allocation2 [shape = 'f32[16,128]{1,0:T(8,128)}', space=vmem, size = 0x2000, scoped, tag = 'scratch operand']
  %s0 = inlined_call_operand.vmem [shape: f32[16,128], index: 0, kind: input, shape index: {}]
  %s1 = inlined_call_operand.vmem [shape: f32[16,128], index: 1, kind: input, shape index: {}]
  %s2 = inlined_call_operand.vmem [shape: f32[1,16,128], index: 2, kind: output, shape index: {}]
  %s3 = sld [smem:[#allocation0]]
  $region26: #{weight_mse_loss.1} parent=0
    _
  %s5 = ssub.s32 1, %s3
  %s6 = scalar_select 0, %s5, %s3
  // Predicated region
  $region2: #{weight_mse_loss.1} parent=0 // pred_check
    _
  $region3: #{weight_mse_loss.1} parent=0 // pred_check_branch
    %8 = sbr.rel (0) target = $region5
  $region4: #{weight_mse_loss.1} parent=0 // pred_region
    %s9 = sadd.s32 0, 0
    %p10 = scmp.lt.s32.totalorder %s9, 0
    %s11 = scalar_select %p10, %s9, 0
    %s12 = smul.u32 2, %s11
    %p13 = scmp.lt.s32.totalorder %s12, 1
    %s14 = scalar_select %p13, %s12, 1
    %s15 = smul.addr %s14, 8
    %s16 = scalar_lea.vmem %s0, %s15
    %s17 = sadd.s32 0, 0
    %p18 = scmp.lt.s32.totalorder %s17, 0
    %s19 = scalar_select %p18, %s17, 0
    %s20 = smul.u32 2, %s19
  $region5: #{weight_mse_loss.1} parent=0 // pred_fallthru
    _
  // Predicated region
  $region6: #{weight_mse_loss.1} parent=0 // pred_check
    _
  $region7: #{weight_mse_loss.1} parent=0 // pred_check_branch
    %22 = sbr.rel (0) target = $region9
  $region8: #{weight_mse_loss.1} parent=0 // pred_region
    %s23 = sadd.s32 0, 0
    %p24 = scmp.lt.s32.totalorder %s23, 0
    %s25 = scalar_select %p24, %s23, 0
    %s26 = smul.u32 2, %s25
    %p27 = scmp.lt.s32.totalorder %s26, 1
    %s28 = scalar_select %p27, %s26, 1
    %s29 = smul.addr %s28, 8
    %s30 = scalar_lea.vmem %s1, %s29
    %s31 = sadd.s32 0, 0
    %p32 = scmp.lt.s32.totalorder %s31, 0
    %s33 = scalar_select %p32, %s31, 0
    %s34 = smul.u32 2, %s33
  $region9: #{weight_mse_loss.1} parent=0 // pred_fallthru
    _
  %s35 = sadd.s32 0, 0
  %p36 = scmp.lt.s32.totalorder %s35, 0
  %s37 = scalar_select %p36, %s35, 0
  %s38 = smul.u32 2, %s37
  %p39 = scmp.lt.s32.totalorder %s38, 1
  %s40 = scalar_select %p39, %s38, 1
  %s41 = smul.addr %s40, 8
  %s42 = scalar_lea.vmem %s0, %s41
  %s43 = sadd.s32 0, 0
  %p44 = scmp.lt.s32.totalorder %s43, 0
  %s45 = scalar_select %p44, %s43, 0
  %s46 = smul.u32 2, %s45
  %p47 = scmp.lt.s32.totalorder %s46, 1
  %s48 = scalar_select %p47, %s46, 1
  %s49 = smul.addr %s48, 8
  %s50 = scalar_lea.vmem %s1, %s49
  %s51 = sadd.s32 0, 0
  %p52 = scmp.lt.s32.totalorder %s51, 0
  %s53 = scalar_select %p52, %s51, 0
  %s54 = smul.u32 2, %s53
  %p55 = scmp.lt.s32.totalorder %s54, 1
  %s56 = scalar_select %p55, %s54, 1
  %s57 = smul.addr %s56, 8
  %s58 = scalar_lea.vmem %s0, %s57
  %s59 = sadd.s32 0, 0
  %p60 = scmp.lt.s32.totalorder %s59, 0
  %s61 = scalar_select %p60, %s59, 0
  %s62 = smul.u32 2, %s61
  %s63 = sadd.s32 0, 0
  %p64 = scmp.lt.s32.totalorder %s63, 0
  %s65 = scalar_select %p64, %s63, 0
  %s66 = smul.u32 2, %s65
  %p67 = scmp.lt.s32.totalorder %s66, 1
  %s68 = scalar_select %p67, %s66, 1
  %s69 = smul.addr %s68, 8
  %s70 = scalar_lea.vmem %s1, %s69
  %s71 = sadd.s32 0, 0
  %p72 = scmp.lt.s32.totalorder %s71, 0
  %s73 = scalar_select %p72, %s71, 0
  %s74 = smul.u32 2, %s73
  %p75 = scmp.eq.s32.totalorder 0, 0
  // Predicated region
  $region10: #{weight_mse_loss.1} parent=0 // pred_check
    %p76 = pneg %p75
  $region11: #{weight_mse_loss.1} parent=0 // pred_check_branch
    %78 = sbr.rel (%p76) target = $region13
  $region12: #{weight_mse_loss.1} parent=0 // pred_region
    %79 = vst [vmem:[#allocation2] sm:$0xff] 0.0
    %80 = vst [vmem:[#allocation2 + $0x8] sm:$0xff] 0.0
  $region13: #{weight_mse_loss.1} parent=0 // pred_fallthru
    _
  %v81 = vld [vmem:[%s58] sm:$0xff]
  %v82 = vld [vmem:[%s58 + $0x8] sm:$0xff]
  %v83 = vld [vmem:[%s70] sm:$0xff]
  %v84 = vld [vmem:[%s70 + $0x8] sm:$0xff]
  %v85 = vsub.f32 %v81, %v83
  %v86 = vsub.f32 %v82, %v84
  %v87 = vmul.f32 %v85, %v85
  %v88 = vmul.f32 %v86, %v86
  %v89 = vmul.f32 %v83, 1.99
  %v90 = vmul.f32 %v84, 1.99
  %v91 = vadd.f32 %v89, 0.01
  %v92 = vadd.f32 %v90, 0.01
  %v93 = vmul.f32 %v87, %v91
  %v94 = vmul.f32 %v88, %v92
  %v95 = vld [vmem:[#allocation2] sm:$0xff]
  %v96 = vld [vmem:[#allocation2 + $0x8] sm:$0xff]
  %v97 = vadd.f32 %v93, 0.0
  %v98 = vadd.f32 %v94, 0.0
  %v99 = vadd.f32 %v95, %v97
  %v100 = vadd.f32 %v96, %v98
  %101 = vst [vmem:[#allocation2] sm:$0xff] %v99
  %102 = vst [vmem:[#allocation2 + $0x8] sm:$0xff] %v100
  // Predicated region
  $region14: #{weight_mse_loss.1} parent=0 // pred_check
    %p103 = pneg %p75
  $region15: #{weight_mse_loss.1} parent=0 // pred_check_branch
    %105 = sbr.rel (%p103) target = $region17
  $region16: #{weight_mse_loss.1} parent=0 // pred_region
    %v106 = vld [vmem:[#allocation2] sm:$0xff]
    %v107 = vld [vmem:[#allocation2 + $0x8] sm:$0xff]
    %v108 = vmul.f32 %v106, 0.00048828125
    %v109 = vmul.f32 %v107, 0.00048828125
    %110 = vst [vmem:[%s2] sm:$0xff] %v108
    %111 = vst [vmem:[%s2 + $0x8] sm:$0xff] %v109
  $region17: #{weight_mse_loss.1} parent=0 // pred_fallthru
    _
  // Predicated region
  $region18: #{weight_mse_loss.1} parent=0 // pred_check
    _
  $region19: #{weight_mse_loss.1} parent=0 // pred_check_branch
    %113 = sbr.rel (0) target = $region21
  $region20: #{weight_mse_loss.1} parent=0 // pred_region
    _
  $region21: #{weight_mse_loss.1} parent=0 // pred_fallthru
    _
  // Predicated region
  $region22: #{weight_mse_loss.1} parent=0 // pred_check
    _
  $region23: #{weight_mse_loss.1} parent=0 // pred_check_branch
    %115 = sbr.rel (0) target = $region25
  $region24: #{weight_mse_loss.1} parent=0 // pred_region
    _
  $region25: #{weight_mse_loss.1} parent=0 // pred_fallthru
    _

</llo_original>
